<compile_context>
chip_gen: v7x
topology: tpu7x:2x2x1
jax: 0.10.0
libtpu: 0.0.40
codegen_flags: <defaults>
</compile_context>

<pallas_src>
import jax
import jax.numpy as jnp
import numpy as np
from jax import lax
from jax.experimental import pallas as pl
from jax.experimental.pallas import tpu as pltpu


def _round_up(x, m):
    return (x + m - 1) // m * m


def _largest_divisor_leq(n, k):
    k = max(1, min(n, k))
    for d in range(k, 0, -1):
        if n % d == 0:
            return d
    return 1


def ws_readout_kernel(n_valid_ref, seq_ref, q_ref, out_ref,
                      m_ref, l_ref, acc_ref):
    # n_valid_ref : (1,) i32 SMEM   number of real (non-pad) nodes
    # seq_ref     : (Bt, tile_n, D) node-feature tile for Bt batches
    # q_ref       : (Bt, 1, D)      query vectors
    # out_ref     : (Bt, 1, D)      readout (written once, on last node tile)
    # m_ref       : (Bt, 1, 1) f32  running max of logits       (scratch)
    # l_ref       : (Bt, 1, 1) f32  running softmax denominator (scratch)
    # acc_ref     : (Bt, 1, D) f32  running weighted feature sum(scratch)
    n_idx = pl.program_id(1)
    tile_n = seq_ref.shape[1]
    n_valid = n_valid_ref[0]

    @pl.when(n_idx == 0)
    def _init():
        m_ref[...] = jnp.full_like(m_ref, -jnp.inf)
        l_ref[...] = jnp.zeros_like(l_ref)
        acc_ref[...] = jnp.zeros_like(acc_ref)

    seq = seq_ref[...]                                    # (Bt, tile_n, D)
    q = q_ref[...]                                        # (Bt, 1, D)

    # Attention logits on the MXU, lane-major layout: (Bt, 1, tile_n).
    s = jnp.einsum('bqd,bnd->bqn', q, seq,
                   preferred_element_type=jnp.float32)

    # Only the (single) ragged last tile pays for pad-row masking.
    def _mask(logits):
        col = n_idx * tile_n + lax.broadcasted_iota(
            jnp.int32, (1, 1, tile_n), 2)
        return jnp.where(col < n_valid, logits, -jnp.inf)

    s = lax.cond((n_idx + 1) * tile_n > n_valid, _mask, lambda x: x, s)

    # Online (streaming) softmax update, flash-attention style.
    m_prev = m_ref[...]                                   # (Bt, 1, 1)
    m_new = jnp.maximum(m_prev, jnp.max(s, axis=-1, keepdims=True))
    # Guard (unreachable with round_up(N, tile_n) padding): a fully-masked
    # tile would give m_new = -inf; keep alpha/p finite instead of NaN.
    m_safe = jnp.where(m_new == -jnp.inf, 0.0, m_new)
    alpha = jnp.exp(m_prev - m_safe)                      # (Bt, 1, 1)
    p = jnp.exp(s - m_safe)                               # (Bt, 1, tile_n)

    l_ref[...] = alpha * l_ref[...] + jnp.sum(p, axis=-1, keepdims=True)
    # Weighted partial readout on the MXU: p @ seq -> (Bt, 1, D).
    pv = jnp.einsum('bqn,bnd->bqd', p.astype(seq.dtype), seq,
                    preferred_element_type=jnp.float32)
    acc_ref[...] = alpha * acc_ref[...] + pv
    m_ref[...] = m_new

    @pl.when(n_idx == pl.num_programs(1) - 1)
    def _finalize():
        inv_l = pl.reciprocal(l_ref[...], approx=False)   # exact 1/denominator
        out_ref[...] = (acc_ref[...] * inv_l).astype(out_ref.dtype)


def ws_readout(seq, query, *, tile_n=2048):
    """seq: (B, N, D), query: (B, 1, D) -> (B, D).  D == 64 in the module."""
    B, N, D = seq.shape
    assert query.shape == (B, 1, D)

    # Sublane granularity: 8 rows for 32-bit dtypes, 16 for 16-bit (bf16).
    sub = 8 if seq.dtype.itemsize >= 4 else 16
    tile_n = min(tile_n, _round_up(N, sub))
    n_pad = _round_up(N, tile_n)
    if n_pad != N:
        seq = jnp.pad(seq, ((0, 0), (0, n_pad - N), (0, 0)))  # zero-pad nodes

    # Batch blocking: aim for ~8192 node-rows (~2 MiB of f32 seq at D=64) per
    # grid step so per-step pipeline overhead is amortized even when N is
    # small.  Bt must divide B.
    batch_tile = _largest_divisor_leq(B, max(1, 8192 // tile_n))

    grid = (B // batch_tile, n_pad // tile_n)
    n_valid = jnp.array([N], dtype=jnp.int32)

    out = pl.pallas_call(
        ws_readout_kernel,
        out_shape=jax.ShapeDtypeStruct((B, 1, D), seq.dtype),
        grid_spec=pltpu.PrefetchScalarGridSpec(
            num_scalar_prefetch=1,
            grid=grid,
            in_specs=[
                pl.BlockSpec((batch_tile, tile_n, D),
                             lambda b, n, nv: (b, n, 0)),      # node features
                pl.BlockSpec((batch_tile, 1, D),
                             lambda b, n, nv: (b, 0, 0)),      # query
            ],
            out_specs=pl.BlockSpec((batch_tile, 1, D),
                                   lambda b, n, nv: (b, 0, 0)),
            scratch_shapes=[
                pltpu.VMEM((batch_tile, 1, 1), jnp.float32),   # running max
                pltpu.VMEM((batch_tile, 1, 1), jnp.float32),   # running denom
                pltpu.VMEM((batch_tile, 1, D), jnp.float32),   # weighted sum
            ],
        ),
        compiler_params=pltpu.CompilerParams(
            dimension_semantics=("parallel", "arbitrary")),
    )(n_valid, seq, query)
    return out.reshape(B, D)


def ws_readout_reference(seq, query):
    q = jnp.transpose(query, (0, 2, 1))                    # (B, D, 1)
    sim = jnp.matmul(seq, q)                               # (B, N, 1)
    sim = jax.nn.softmax(sim, axis=1)
    sim = jnp.tile(sim, (1, 1, seq.shape[-1]))             # repeat(1, 1, 64)
    return jnp.sum(seq * sim, axis=1)                      # (B, D)


if __name__ == "__main__":
    # D = 64 matches the hard-coded sim.repeat(1, 1, 64) in the PyTorch module.
    B, N, D = 2, 200, 64

    key = jax.random.PRNGKey(0)
    k_seq, k_q = jax.random.split(key)
    seq = jax.random.normal(k_seq, (B, N, D), dtype=jnp.float32)
    query = jax.random.normal(k_q, (B, 1, D), dtype=jnp.float32)

    # Default tile_n clamps to round_up(N, 8) = 208 here, exercising the
    # ragged (masked) last-tile path and batch blocking (Bt = 2).
    out = ws_readout(seq, query)
    out = jax.block_until_ready(out)

    ref = ws_readout_reference(seq, query)
    np.testing.assert_allclose(np.asarray(out), np.asarray(ref),
                               rtol=1e-4, atol=1e-4)

    print("KERNEL_OK")
</pallas_src>

<mosaic_0001>
module attributes {stable_mosaic.version = 11 : i64} {
  func.func @ws_readout_kernel(%arg0: i32, %arg1: i32, %arg2: memref<1xi32, #tpu.memory_space<smem>>, %arg3: memref<2x200x64xf32, #tpu.memory_space<vmem>>, %arg4: memref<2x1x64xf32, #tpu.memory_space<vmem>>, %arg5: memref<2x1x64xf32, #tpu.memory_space<vmem>>, %arg6: memref<2x1x1xf32, #tpu.memory_space<vmem>>, %arg7: memref<2x1x1xf32, #tpu.memory_space<vmem>>, %arg8: memref<2x1x64xf32, #tpu.memory_space<vmem>>) attributes {dimension_semantics = [#tpu.dimension_semantics<parallel>, #tpu.dimension_semantics<arbitrary>], iteration_bounds = array<i64: 1, 1>, scalar_prefetch = 1 : i64, scratch_operands = 3 : i64, tpu.core_type = #tpu.core_type<tc>, window_params = [{transform_indices = @transform_0, window_bounds = array<i64: 2, 200, 64>}, {transform_indices = @transform_1, window_bounds = array<i64: 2, 1, 64>}, {transform_indices = @transform_2, window_bounds = array<i64: 2, 1, 64>}]} {
    %c0 = arith.constant 0 : index
    %0 = memref.load %arg2[%c0] : memref<1xi32, #tpu.memory_space<smem>>
    %c0_i32 = arith.constant 0 : i32
    %1 = arith.cmpi eq, %arg1, %c0_i32 : i32
    %2 = arith.extui %1 : i1 to i32
    %c0_i32_0 = arith.constant 0 : i32
    %3 = arith.cmpi ne, %2, %c0_i32_0 : i32
    scf.if %3 {
      %cst_33 = arith.constant 0xFF800000 : f32
      %42 = vector.broadcast %cst_33 : f32 to vector<2x1x1xf32>
      %c0_34 = arith.constant 0 : index
      %c0_35 = arith.constant 0 : index
      %c0_36 = arith.constant 0 : index
      %43 = vector.load %arg6[%c0_34, %c0_35, %c0_36] : memref<2x1x1xf32, #tpu.memory_space<vmem>>, vector<2x1x1xf32>
      tpu.vector_store %arg6[%c0_34, %c0_35, %c0_36], %42 {strides = array<i32>} : memref<2x1x1xf32, #tpu.memory_space<vmem>>, vector<2x1x1xf32>,
      %cst_37 = arith.constant 0.000000e+00 : f32
      %44 = vector.broadcast %cst_37 : f32 to vector<2x1x1xf32>
      %c0_38 = arith.constant 0 : index
      %c0_39 = arith.constant 0 : index
      %c0_40 = arith.constant 0 : index
      %45 = vector.load %arg7[%c0_38, %c0_39, %c0_40] : memref<2x1x1xf32, #tpu.memory_space<vmem>>, vector<2x1x1xf32>
      tpu.vector_store %arg7[%c0_38, %c0_39, %c0_40], %44 {strides = array<i32>} : memref<2x1x1xf32, #tpu.memory_space<vmem>>, vector<2x1x1xf32>,
      %cst_41 = arith.constant 0.000000e+00 : f32
      %46 = vector.broadcast %cst_41 : f32 to vector<2x1x64xf32>
      %c0_42 = arith.constant 0 : index
      %c0_43 = arith.constant 0 : index
      %c0_44 = arith.constant 0 : index
      %47 = vector.load %arg8[%c0_42, %c0_43, %c0_44] : memref<2x1x64xf32, #tpu.memory_space<vmem>>, vector<2x1x64xf32>
      tpu.vector_store %arg8[%c0_42, %c0_43, %c0_44], %46 {strides = array<i32>} : memref<2x1x64xf32, #tpu.memory_space<vmem>>, vector<2x1x64xf32>,
    } else {
    }
    %c0_1 = arith.constant 0 : index
    %c0_2 = arith.constant 0 : index
    %c0_3 = arith.constant 0 : index
    %4 = vector.load %arg3[%c0_1, %c0_2, %c0_3] : memref<2x200x64xf32, #tpu.memory_space<vmem>>, vector<2x200x64xf32>
    %c0_4 = arith.constant 0 : index
    %c0_5 = arith.constant 0 : index
    %c0_6 = arith.constant 0 : index
    %5 = vector.load %arg4[%c0_4, %c0_5, %c0_6] : memref<2x1x64xf32, #tpu.memory_space<vmem>>, vector<2x1x64xf32>
    "tpu.trace_start"() <{level = 10 : i32, message = "bqd,bnd->bqn"}> : () -> ()
    %cst = arith.constant dense<0.000000e+00> : vector<2x1x200xf32>
    %6 = tpu.matmul %5, %4, %cst {dimension_numbers = #tpu.dot_dimension_numbers<[2], [2], [1], [1], [0, 0, 0, 1, 1, 1], [0], [0]>} : vector<2x1x64xf32>, vector<2x200x64xf32>, vector<2x1x200xf32> -> vector<2x1x200xf32>
    "tpu.trace_stop"() : () -> ()
    %c1_i32 = arith.constant 1 : i32
    %7 = arith.addi %arg1, %c1_i32 : i32
    %c200_i32 = arith.constant 200 : i32
    %8 = arith.muli %7, %c200_i32 : i32
    %9 = arith.cmpi sgt, %8, %0 : i32
    %10 = arith.extui %9 : i1 to i32
    %c0_i32_7 = arith.constant 0 : i32
    %11 = arith.cmpi ne, %10, %c0_i32_7 : i32
    %12 = scf.if %11 -> (vector<2x1x200xf32>) {
      %c200_i32_33 = arith.constant 200 : i32
      %42 = arith.muli %arg1, %c200_i32_33 : i32
      %43 = tpu.iota {dimensions = array<i32: 2>} : vector<1x1x200xi32>
      %44 = vector.broadcast %42 : i32 to vector<1x1x200xi32>
      %45 = arith.addi %44, %43 : vector<1x1x200xi32>
      %46 = vector.broadcast %0 : i32 to vector<1x1x200xi32>
      %47 = arith.cmpi slt, %45, %46 : vector<1x1x200xi32>
      %cst_34 = arith.constant 0xFF800000 : f32
      %48 = vector.shape_cast %47 : vector<1x1x200xi1> to vector<1x1x200xi1>
      %49 = vector.broadcast %48 : vector<1x1x200xi1> to vector<2x1x200xi1>
      %50 = vector.broadcast %cst_34 : f32 to vector<2x1x200xf32>
      %51 = arith.select %49, %6, %50 : vector<2x1x200xi1>, vector<2x1x200xf32>
      scf.yield %51 : vector<2x1x200xf32>
    } else {
      scf.yield %6 : vector<2x1x200xf32>
    }
    %c0_8 = arith.constant 0 : index
    %c0_9 = arith.constant 0 : index
    %c0_10 = arith.constant 0 : index
    %13 = vector.load %arg6[%c0_8, %c0_9, %c0_10] : memref<2x1x1xf32, #tpu.memory_space<vmem>>, vector<2x1x1xf32>
    %cst_11 = arith.constant dense<0xFF800000> : vector<2x1xf32>
    %14 = vector.multi_reduction <maximumf>, %12, %cst_11 [2] : vector<2x1x200xf32> to vector<2x1xf32>
    %15 = vector.shape_cast %14 : vector<2x1xf32> to vector<2x1x1xf32>
    %16 = arith.maximumf %13, %15 : vector<2x1x1xf32>
    %cst_12 = arith.constant 0xFF800000 : f32
    %17 = vector.broadcast %cst_12 : f32 to vector<2x1x1xf32>
    %18 = arith.cmpf oeq, %16, %17 : vector<2x1x1xf32>
    %cst_13 = arith.constant 0.000000e+00 : f32
    %19 = vector.broadcast %cst_13 : f32 to vector<2x1x1xf32>
    %20 = arith.select %18, %19, %16 : vector<2x1x1xi1>, vector<2x1x1xf32>
    %21 = arith.subf %13, %20 : vector<2x1x1xf32>
    %22 = math.exp %21 : vector<2x1x1xf32>
    %23 = vector.broadcast %20 : vector<2x1x1xf32> to vector<2x1x200xf32>
    %24 = arith.subf %12, %23 : vector<2x1x200xf32>
    %25 = math.exp %24 : vector<2x1x200xf32>
    %c0_14 = arith.constant 0 : index
    %c0_15 = arith.constant 0 : index
    %c0_16 = arith.constant 0 : index
    %26 = vector.load %arg7[%c0_14, %c0_15, %c0_16] : memref<2x1x1xf32, #tpu.memory_space<vmem>>, vector<2x1x1xf32>
    %27 = arith.mulf %22, %26 : vector<2x1x1xf32>
    %cst_17 = arith.constant dense<0.000000e+00> : vector<2x1xf32>
    %28 = vector.multi_reduction <add>, %25, %cst_17 [2] : vector<2x1x200xf32> to vector<2x1xf32>
    %29 = vector.shape_cast %28 : vector<2x1xf32> to vector<2x1x1xf32>
    %30 = arith.addf %27, %29 : vector<2x1x1xf32>
    %c0_18 = arith.constant 0 : index
    %c0_19 = arith.constant 0 : index
    %c0_20 = arith.constant 0 : index
    %31 = vector.load %arg7[%c0_18, %c0_19, %c0_20] : memref<2x1x1xf32, #tpu.memory_space<vmem>>, vector<2x1x1xf32>
    tpu.vector_store %arg7[%c0_18, %c0_19, %c0_20], %30 {strides = array<i32>} : memref<2x1x1xf32, #tpu.memory_space<vmem>>, vector<2x1x1xf32>,
    "tpu.trace_start"() <{level = 10 : i32, message = "bqn,bnd->bqd"}> : () -> ()
    %cst_21 = arith.constant dense<0.000000e+00> : vector<2x1x64xf32>
    %32 = tpu.matmul %25, %4, %cst_21 {dimension_numbers = #tpu.dot_dimension_numbers<[2], [1], [1], [2], [0, 0, 0, 1, 1, 2], [0], [0]>} : vector<2x1x200xf32>, vector<2x200x64xf32>, vector<2x1x64xf32> -> vector<2x1x64xf32>
    "tpu.trace_stop"() : () -> ()
    %c0_22 = arith.constant 0 : index
    %c0_23 = arith.constant 0 : index
    %c0_24 = arith.constant 0 : index
    %33 = vector.load %arg8[%c0_22, %c0_23, %c0_24] : memref<2x1x64xf32, #tpu.memory_space<vmem>>, vector<2x1x64xf32>
    %34 = vector.broadcast %22 : vector<2x1x1xf32> to vector<2x1x64xf32>
    %35 = arith.mulf %34, %33 : vector<2x1x64xf32>
    %36 = arith.addf %35, %32 : vector<2x1x64xf32>
    %c0_25 = arith.constant 0 : index
    %c0_26 = arith.constant 0 : index
    %c0_27 = arith.constant 0 : index
    %37 = vector.load %arg8[%c0_25, %c0_26, %c0_27] : memref<2x1x64xf32, #tpu.memory_space<vmem>>, vector<2x1x64xf32>
    tpu.vector_store %arg8[%c0_25, %c0_26, %c0_27], %36 {strides = array<i32>} : memref<2x1x64xf32, #tpu.memory_space<vmem>>, vector<2x1x64xf32>,
    %c0_28 = arith.constant 0 : index
    %c0_29 = arith.constant 0 : index
    %c0_30 = arith.constant 0 : index
    %38 = vector.load %arg6[%c0_28, %c0_29, %c0_30] : memref<2x1x1xf32, #tpu.memory_space<vmem>>, vector<2x1x1xf32>
    tpu.vector_store %arg6[%c0_28, %c0_29, %c0_30], %16 {strides = array<i32>} : memref<2x1x1xf32, #tpu.memory_space<vmem>>, vector<2x1x1xf32>,
    %c0_i32_31 = arith.constant 0 : i32
    %39 = arith.cmpi eq, %arg1, %c0_i32_31 : i32
    %40 = arith.extui %39 : i1 to i32
    %c0_i32_32 = arith.constant 0 : i32
    %41 = arith.cmpi ne, %40, %c0_i32_32 : i32
    scf.if %41 {
      %c0_33 = arith.constant 0 : index
      %c0_34 = arith.constant 0 : index
      %c0_35 = arith.constant 0 : index
      %42 = vector.load %arg7[%c0_33, %c0_34, %c0_35] : memref<2x1x1xf32, #tpu.memory_space<vmem>>, vector<2x1x1xf32>
      %43 = tpu.reciprocal %42 : vector<2x1x1xf32> -> vector<2x1x1xf32>
      %c0_36 = arith.constant 0 : index
      %c0_37 = arith.constant 0 : index
      %c0_38 = arith.constant 0 : index
      %44 = vector.load %arg8[%c0_36, %c0_37, %c0_38] : memref<2x1x64xf32, #tpu.memory_space<vmem>>, vector<2x1x64xf32>
      %45 = vector.broadcast %43 : vector<2x1x1xf32> to vector<2x1x64xf32>
      %46 = arith.mulf %44, %45 : vector<2x1x64xf32>
      %c0_39 = arith.constant 0 : index
      %c0_40 = arith.constant 0 : index
      %c0_41 = arith.constant 0 : index
      %47 = vector.load %arg5[%c0_39, %c0_40, %c0_41] : memref<2x1x64xf32, #tpu.memory_space<vmem>>, vector<2x1x64xf32>
      tpu.vector_store %arg5[%c0_39, %c0_40, %c0_41], %46 {strides = array<i32>} : memref<2x1x64xf32, #tpu.memory_space<vmem>>, vector<2x1x64xf32>,
    } else {
    }
    return
  }
  func.func @transform_0(%arg0: i32, %arg1: i32, %arg2: memref<1xi32, #tpu.memory_space<smem>>) -> (i32, i32, i32) {
    %c0_i32 = arith.constant 0 : i32
    %c0_i32_0 = arith.constant 0 : i32
    return %arg0, %arg1, %c0_i32 : i32, i32, i32
  }
  func.func @transform_1(%arg0: i32, %arg1: i32, %arg2: memref<1xi32, #tpu.memory_space<smem>>) -> (i32, i32, i32) {
    %c0_i32 = arith.constant 0 : i32
    %c0_i32_0 = arith.constant 0 : i32
    %c0_i32_1 = arith.constant 0 : i32
    return %arg0, %c0_i32, %c0_i32_0 : i32, i32, i32
  }
  func.func @transform_2(%arg0: i32, %arg1: i32, %arg2: memref<1xi32, #tpu.memory_space<smem>>) -> (i32, i32, i32) {
    %c0_i32 = arith.constant 0 : i32
    %c0_i32_0 = arith.constant 0 : i32
    %c0_i32_1 = arith.constant 0 : i32
    return %arg0, %c0_i32, %c0_i32_0 : i32, i32, i32
  }
}

</mosaic_0001>

<llo_original>
// kernel: tpu_custom_call.1
$region0: #{tpu_custom_call.1}
  #allocation0 [shape = 'u32[]', space=smem, size = 0x4, offset = 0x4, fixed_abs, tag = 'smem constant byte address 0x4 - core index']
  #allocation1 [shape = 'u32[144,128]{1,0:T(1,128)}', space=vmem, size = 0x12000, scoped, tag = 'internal scratch']
  #allocation2 [shape = 'f32[2,1,1]{2,1,0:T(1,128)}', space=vmem, size = 0x400, scoped, tag = 'scratch operand']
  #allocation3 [shape = 'f32[2,1,1]{2,1,0:T(1,128)}', space=vmem, size = 0x400, scoped, tag = 'scratch operand']
  #allocation4 [shape = 'f32[2,1,64]{2,1,0:T(1,128)}', space=vmem, size = 0x400, scoped, tag = 'scratch operand']
  #allocation5 [shape = 's32[1]{0}', space=sflag, size = 0x4, scoped, tag = 'scoped memory for tpu_custom_call.1']
  #allocation6 [shape = 's32[1]{0:T(128)S(6)}', space=smem, size = 0x200, scoped, tag = 'prefetched SMEM operand 0']
  %s0 = inlined_call_operand.<no memory space> [shape: s32[1], index: 0, kind: input, shape index: {}]
  %s1 = inlined_call_operand.vmem [shape: f32[2,200,64], index: 1, kind: input, shape index: {}]
  %s2 = inlined_call_operand.vmem [shape: f32[2,1,64], index: 2, kind: input, shape index: {}]
  %s3 = inlined_call_operand.hbm [shape: f32[2,1,64], index: 3, kind: output, shape index: {}]
  %s4 = sld [smem:[#allocation0]]
  $region34: #{tpu_custom_call.1} parent=0
    _
  %s6 = ssub.s32 1, %s4
  %s7 = scalar_select 0, %s6, %s4
  %8 = sst [smem:[#allocation6]] %s0
  $region1: #{tpu_custom_call.1} parent=0
    #allocation7 [shape = 'u8[1024]{0}', space=vmem, size = 0x400, scoped, tag = 'output window, operand 0, single buffered']
    #allocation8 [shape = 's32[1]{0}', space=sflag, size = 0x4, scoped, tag = 'scoped memory for tpu_custom_call.1']
    %9 = vsyncpa [#allocation8], 0
    // Predicated region
    $region2: #{tpu_custom_call.1} parent=1 // pred_check
      _
    $region3: #{tpu_custom_call.1} parent=1 // pred_check_branch
      %11 = sbr.rel (0) target = $region5
    $region4: #{tpu_custom_call.1} parent=1 // pred_region
      _
    $region5: #{tpu_custom_call.1} parent=1 // pred_fallthru
      _
    // Predicated region
    $region6: #{tpu_custom_call.1} parent=1 // pred_check
      _
    $region7: #{tpu_custom_call.1} parent=1 // pred_check_branch
      %13 = sbr.rel (0) target = $region9
    $region8: #{tpu_custom_call.1} parent=1 // pred_region
      _
    $region9: #{tpu_custom_call.1} parent=1 // pred_fallthru
      _
    %s14 = sld [smem:[#allocation6]]
    %p15 = scmp.eq.s32.totalorder 0, 0
    // Predicated region
    $region10: #{tpu_custom_call.1} parent=1 // pred_check
      %p16 = pneg %p15
    $region11: #{tpu_custom_call.1} parent=1 // pred_check_branch
      %18 = sbr.rel (%p16) target = $region13
    $region12: #{tpu_custom_call.1} parent=1 // pred_region
      %vm19 = vcmask 0
      %20 = vst.msk [vmem:[#allocation2] sm:$0x1] %vm19, -inf
      %21 = vst.msk [vmem:[#allocation2 + $0x1] sm:$0x1] %vm19, -inf
      %22 = vst.msk [vmem:[#allocation3] sm:$0x1] %vm19, 0.0
      %23 = vst.msk [vmem:[#allocation3 + $0x1] sm:$0x1] %vm19, 0.0
      %vm24 = vcmask 516096
      %25 = vst.msk [vmem:[#allocation4] sm:$0x1] %vm24, 0.0
      %26 = vst.msk [vmem:[#allocation4 + $0x1] sm:$0x1] %vm24, 0.0
    $region13: #{tpu_custom_call.1} parent=1 // pred_fallthru
      _
    %v27 = vld [vmem:[%s1] sm:$0xff]
    %v28 = vld [vmem:[%s1 + $0x8] sm:$0xff]
    %v29 = vld [vmem:[%s1 + $0x10] sm:$0xff]
    %v30 = vld [vmem:[%s1 + $0x18] sm:$0xff]
    %v31 = vld [vmem:[%s1 + $0x20] sm:$0xff]
    %v32 = vld [vmem:[%s1 + $0x28] sm:$0xff]
    %v33 = vld [vmem:[%s1 + $0x30] sm:$0xff]
    %v34 = vld [vmem:[%s1 + $0x38] sm:$0xff]
    %v35 = vld [vmem:[%s1 + $0x40] sm:$0xff]
    %v36 = vld [vmem:[%s1 + $0x48] sm:$0xff]
    %v37 = vld [vmem:[%s1 + $0x50] sm:$0xff]
    %v38 = vld [vmem:[%s1 + $0x58] sm:$0xff]
    %v39 = vld [vmem:[%s1 + $0x60] sm:$0xff]
    %v40 = vld [vmem:[%s1 + $0x68] sm:$0xff]
    %v41 = vld [vmem:[%s1 + $0x70] sm:$0xff]
    %v42 = vld [vmem:[%s1 + $0x78] sm:$0xff]
    %v43 = vld [vmem:[%s1 + $0x80] sm:$0xff]
    %v44 = vld [vmem:[%s1 + $0x88] sm:$0xff]
    %v45 = vld [vmem:[%s1 + $0x90] sm:$0xff]
    %v46 = vld [vmem:[%s1 + $0x98] sm:$0xff]
    %v47 = vld [vmem:[%s1 + $0xa0] sm:$0xff]
    %v48 = vld [vmem:[%s1 + $0xa8] sm:$0xff]
    %v49 = vld [vmem:[%s1 + $0xb0] sm:$0xff]
    %v50 = vld [vmem:[%s1 + $0xb8] sm:$0xff]
    %v51 = vld [vmem:[%s1 + $0xc0] sm:$0xff]
    %v52 = vld [vmem:[%s1 + $0xc8] sm:$0xff]
    %v53 = vld [vmem:[%s1 + $0xd0] sm:$0xff]
    %v54 = vld [vmem:[%s1 + $0xd8] sm:$0xff]
    %v55 = vld [vmem:[%s1 + $0xe0] sm:$0xff]
    %v56 = vld [vmem:[%s1 + $0xe8] sm:$0xff]
    %v57 = vld [vmem:[%s1 + $0xf0] sm:$0xff]
    %v58 = vld [vmem:[%s1 + $0xf8] sm:$0xff]
    %v59 = vld [vmem:[%s1 + $0x100] sm:$0xff]
    %v60 = vld [vmem:[%s1 + $0x108] sm:$0xff]
    %v61 = vld [vmem:[%s1 + $0x110] sm:$0xff]
    %v62 = vld [vmem:[%s1 + $0x118] sm:$0xff]
    %v63 = vld [vmem:[%s1 + $0x120] sm:$0xff]
    %v64 = vld [vmem:[%s1 + $0x128] sm:$0xff]
    %v65 = vld [vmem:[%s1 + $0x130] sm:$0xff]
    %v66 = vld [vmem:[%s1 + $0x138] sm:$0xff]
    %v67 = vld [vmem:[%s1 + $0x140] sm:$0xff]
    %v68 = vld [vmem:[%s1 + $0x148] sm:$0xff]
    %v69 = vld [vmem:[%s1 + $0x150] sm:$0xff]
    %v70 = vld [vmem:[%s1 + $0x158] sm:$0xff]
    %v71 = vld [vmem:[%s1 + $0x160] sm:$0xff]
    %v72 = vld [vmem:[%s1 + $0x168] sm:$0xff]
    %v73 = vld [vmem:[%s1 + $0x170] sm:$0xff]
    %v74 = vld [vmem:[%s1 + $0x178] sm:$0xff]
    %v75 = vld [vmem:[%s1 + $0x180] sm:$0xff]
    %v76 = vld [vmem:[%s1 + $0x188] sm:$0xff]
    %v77 = vld [vmem:[%s2] sm:$0x1]
    %v78 = vld [vmem:[%s2 + $0x1] sm:$0x1]
    %vm79 = vcmask 523264
    %v81 = vsel %vm79, %v77, 0
    %v84 = vsel %vm79, %v27, 0
    %v87 = vsel %vm79, %v28, 0
    %v90 = vsel %vm79, %v29, 0
    %v93 = vsel %vm79, %v30, 0
    %v96 = vsel %vm79, %v31, 0
    %v99 = vsel %vm79, %v32, 0
    %v102 = vsel %vm79, %v33, 0
    %v105 = vsel %vm79, %v34, 0
    %v108 = vsel %vm79, %v35, 0
    %v111 = vsel %vm79, %v36, 0
    %v114 = vsel %vm79, %v37, 0
    %v117 = vsel %vm79, %v38, 0
    %v120 = vsel %vm79, %v39, 0
    %v123 = vsel %vm79, %v40, 0
    %v126 = vsel %vm79, %v41, 0
    %v129 = vsel %vm79, %v42, 0
    %v132 = vsel %vm79, %v43, 0
    %v135 = vsel %vm79, %v44, 0
    %v138 = vsel %vm79, %v45, 0
    %v141 = vsel %vm79, %v46, 0
    %v144 = vsel %vm79, %v47, 0
    %v147 = vsel %vm79, %v48, 0
    %v150 = vsel %vm79, %v49, 0
    %v153 = vsel %vm79, %v50, 0
    %v156 = vsel %vm79, %v51, 0
    %158 = vmatprep.subr.mxu0 0.0
    %159 = vmatpush1.xpose.msra.mxu0 %v84
    %160 = vmatprep.subr.mxu0 0.0
    %161 = vmatpush1.xpose.msra.mxu0 %v87
    %162 = vmatprep.subr.mxu0 0.0
    %163 = vmatpush1.xpose.msra.mxu0 %v90
    %164 = vmatprep.subr.mxu0 0.0
    %165 = vmatpush1.xpose.msra.mxu0 %v93
    %166 = vmatprep.subr.mxu0 0.0
    %167 = vmatpush1.xpose.msra.mxu0 %v96
    %168 = vmatprep.subr.mxu0 0.0
    %169 = vmatpush1.xpose.msra.mxu0 %v99
    %170 = vmatprep.subr.mxu0 0.0
    %171 = vmatpush1.xpose.msra.mxu0 %v102
    %172 = vmatprep.subr.mxu0 0.0
    %173 = vmatpush1.xpose.msra.mxu0 %v105
    %174 = vmatprep.subr.mxu0 0.0
    %175 = vmatpush1.xpose.msra.mxu0 %v108
    %176 = vmatprep.subr.mxu0 0.0
    %177 = vmatpush1.xpose.msra.mxu0 %v111
    %178 = vmatprep.subr.mxu0 0.0
    %179 = vmatpush1.xpose.msra.mxu0 %v114
    %180 = vmatprep.subr.mxu0 0.0
    %181 = vmatpush1.xpose.msra.mxu0 %v117
    %182 = vmatprep.subr.mxu0 0.0
    %183 = vmatpush1.xpose.msra.mxu0 %v120
    %184 = vmatprep.subr.mxu0 0.0
    %185 = vmatpush1.xpose.msra.mxu0 %v123
    %186 = vmatprep.subr.mxu0 0.0
    %187 = vmatpush1.xpose.msra.mxu0 %v126
    %188 = vmatprep.subr.mxu0 0.0
    %189 = vmatpush1.xpose.msra.mxu0 %v129
    %190 = vmatprep.subr.mxu0 0.0
    %191 = vmatpush1.xpose.msra.mxu0 %v132
    %192 = vmatprep.subr.mxu0 0.0
    %193 = vmatpush1.xpose.msra.mxu0 %v135
    %194 = vmatprep.subr.mxu0 0.0
    %195 = vmatpush1.xpose.msra.mxu0 %v138
    %196 = vmatprep.subr.mxu0 0.0
    %197 = vmatpush1.xpose.msra.mxu0 %v141
    %198 = vmatprep.subr.mxu0 0.0
    %199 = vmatpush1.xpose.msra.mxu0 %v144
    %200 = vmatprep.subr.mxu0 0.0
    %201 = vmatpush1.xpose.msra.mxu0 %v147
    %202 = vmatprep.subr.mxu0 0.0
    %203 = vmatpush1.xpose.msra.mxu0 %v150
    %204 = vmatprep.subr.mxu0 0.0
    %205 = vmatpush1.xpose.msra.mxu0 %v153
    %206 = vmatprep.subr.mxu0 0.0
    %207 = vmatpush1.xpose.msra.mxu0 %v156
    %208 = vmatprep.subr.mxu0 0.0
    %209 = vmatpush1.xpose.msra.mxu0 0.0
    %210 = vmatprep.subr.mxu0 0.0
    %211 = vmatpush1.xpose.msra.mxu0 0.0
    %212 = vmatprep.subr.mxu0 0.0
    %213 = vmatpush1.xpose.msra.mxu0 0.0
    %214 = vmatprep.subr.mxu0 0.0
    %215 = vmatpush1.xpose.msra.mxu0 0.0
    %216 = vmatprep.subr.mxu0 0.0
    %217 = vmatpush1.xpose.msra.mxu0 0.0
    %218 = vmatprep.subr.mxu0 0.0
    %219 = vmatpush1.xpose.msra.mxu0 0.0
    %220 = vmatprep.subr.mxu0 0.0
    %221 = vmatpush1.xpose.msra.mxu0 0.0
    %222 = vmatprep.mubr.f32.mxu0 0.0
    %223 = vmatmul.mubr.f32.gmra.mrb[0].mxu0 %v81
    %v224 = vpop.f32.mrb[0].mxu0
    %v225 = vadd.f32 0.0, %v224
    %v226 = vpop.f32.mrb[0].mxu0
    %v227 = vadd.f32 0.0, %v226
    %228 = vdwg.mxu0
    %v230 = vsel %vm79, %v78, 0
    %v233 = vsel %vm79, %v52, 0
    %v236 = vsel %vm79, %v53, 0
    %v239 = vsel %vm79, %v54, 0
    %v242 = vsel %vm79, %v55, 0
    %v245 = vsel %vm79, %v56, 0
    %v248 = vsel %vm79, %v57, 0
    %v251 = vsel %vm79, %v58, 0
    %v254 = vsel %vm79, %v59, 0
    %v257 = vsel %vm79, %v60, 0
    %v260 = vsel %vm79, %v61, 0
    %v263 = vsel %vm79, %v62, 0
    %v266 = vsel %vm79, %v63, 0
    %v269 = vsel %vm79, %v64, 0
    %v272 = vsel %vm79, %v65, 0
    %v275 = vsel %vm79, %v66, 0
    %v278 = vsel %vm79, %v67, 0
    %v281 = vsel %vm79, %v68, 0
    %v284 = vsel %vm79, %v69, 0
    %v287 = vsel %vm79, %v70, 0
    %v290 = vsel %vm79, %v71, 0
    %v293 = vsel %vm79, %v72, 0
    %v296 = vsel %vm79, %v73, 0
    %v299 = vsel %vm79, %v74, 0
    %v302 = vsel %vm79, %v75, 0
    %v305 = vsel %vm79, %v76, 0
    %307 = vmatprep.subr.mxu0 0.0
    %308 = vmatpush1.xpose.msra.mxu0 %v233
    %309 = vmatprep.subr.mxu0 0.0
    %310 = vmatpush1.xpose.msra.mxu0 %v236
    %311 = vmatprep.subr.mxu0 0.0
    %312 = vmatpush1.xpose.msra.mxu0 %v239
    %313 = vmatprep.subr.mxu0 0.0
    %314 = vmatpush1.xpose.msra.mxu0 %v242
    %315 = vmatprep.subr.mxu0 0.0
    %316 = vmatpush1.xpose.msra.mxu0 %v245
    %317 = vmatprep.subr.mxu0 0.0
    %318 = vmatpush1.xpose.msra.mxu0 %v248
    %319 = vmatprep.subr.mxu0 0.0
    %320 = vmatpush1.xpose.msra.mxu0 %v251
    %321 = vmatprep.subr.mxu0 0.0
    %322 = vmatpush1.xpose.msra.mxu0 %v254
    %323 = vmatprep.subr.mxu0 0.0
    %324 = vmatpush1.xpose.msra.mxu0 %v257
    %325 = vmatprep.subr.mxu0 0.0
    %326 = vmatpush1.xpose.msra.mxu0 %v260
    %327 = vmatprep.subr.mxu0 0.0
    %328 = vmatpush1.xpose.msra.mxu0 %v263
    %329 = vmatprep.subr.mxu0 0.0
    %330 = vmatpush1.xpose.msra.mxu0 %v266
    %331 = vmatprep.subr.mxu0 0.0
    %332 = vmatpush1.xpose.msra.mxu0 %v269
    %333 = vmatprep.subr.mxu0 0.0
    %334 = vmatpush1.xpose.msra.mxu0 %v272
    %335 = vmatprep.subr.mxu0 0.0
    %336 = vmatpush1.xpose.msra.mxu0 %v275
    %337 = vmatprep.subr.mxu0 0.0
    %338 = vmatpush1.xpose.msra.mxu0 %v278
    %339 = vmatprep.subr.mxu0 0.0
    %340 = vmatpush1.xpose.msra.mxu0 %v281
    %341 = vmatprep.subr.mxu0 0.0
    %342 = vmatpush1.xpose.msra.mxu0 %v284
    %343 = vmatprep.subr.mxu0 0.0
    %344 = vmatpush1.xpose.msra.mxu0 %v287
    %345 = vmatprep.subr.mxu0 0.0
    %346 = vmatpush1.xpose.msra.mxu0 %v290
    %347 = vmatprep.subr.mxu0 0.0
    %348 = vmatpush1.xpose.msra.mxu0 %v293
    %349 = vmatprep.subr.mxu0 0.0
    %350 = vmatpush1.xpose.msra.mxu0 %v296
    %351 = vmatprep.subr.mxu0 0.0
    %352 = vmatpush1.xpose.msra.mxu0 %v299
    %353 = vmatprep.subr.mxu0 0.0
    %354 = vmatpush1.xpose.msra.mxu0 %v302
    %355 = vmatprep.subr.mxu0 0.0
    %356 = vmatpush1.xpose.msra.mxu0 %v305
    %357 = vmatprep.subr.mxu0 0.0
    %358 = vmatpush1.xpose.msra.mxu0 0.0
    %359 = vmatprep.subr.mxu0 0.0
    %360 = vmatpush1.xpose.msra.mxu0 0.0
    %361 = vmatprep.subr.mxu0 0.0
    %362 = vmatpush1.xpose.msra.mxu0 0.0
    %363 = vmatprep.subr.mxu0 0.0
    %364 = vmatpush1.xpose.msra.mxu0 0.0
    %365 = vmatprep.subr.mxu0 0.0
    %366 = vmatpush1.xpose.msra.mxu0 0.0
    %367 = vmatprep.subr.mxu0 0.0
    %368 = vmatpush1.xpose.msra.mxu0 0.0
    %369 = vmatprep.subr.mxu0 0.0
    %370 = vmatpush1.xpose.msra.mxu0 0.0
    %371 = vmatprep.mubr.f32.mxu0 0.0
    %372 = vmatmul.mubr.f32.gmra.mrb[0].mxu0 %v230
    %v373 = vpop.f32.mrb[0].mxu0
    %v374 = vadd.f32 0.0, %v373
    %v375 = vpop.f32.mrb[0].mxu0
    %v376 = vadd.f32 0.0, %v375
    %377 = vdwg.mxu0
    %s378 = sadd.s32 0, 1
    %s379 = smul.u32 %s378, 200
    %p380 = scmp.gt.s32.totalorder %s379, %s14
    // Predicated region
    $region14: #{tpu_custom_call.1} parent=1 // pred_check
      %p381 = pneg %p380
    $region15: #{tpu_custom_call.1} parent=1 // pred_check_branch
      %383 = sbr.rel (%p381) target = $region17
    $region16: #{tpu_custom_call.1} parent=1 // pred_region
      %s384 = smul.u32 0, 200
      %v385 = vlaneseq
      %v386 = vand.u32 %v385, 127
      %v387 = vadd.s32 %v386, 128
      %v388 = vstv %s384
      %v389 = vadd.s32 %v388, %v386
      %v390 = vadd.s32 %v388, %v387
      %v391 = vstv %s14
      %vm392 = vcmp.lt.s32.totalorder %v389, %v391
      %vm393 = vcmp.lt.s32.totalorder %v390, %v391
      %v394 = vsel %vm392, 1, 0
      %v395 = vsel %vm393, 1, 0
      %vm396 = vcmp.eq.s32.totalorder %v394, 1
      %vm397 = vcmp.eq.s32.totalorder %v395, 1
      %v398 = vsel %vm396, %v225, -inf
      %v399 = vsel %vm397, %v227, -inf
      %v400 = vsel %vm396, %v374, -inf
      %v401 = vsel %vm397, %v376, -inf
    $region17: #{tpu_custom_call.1} parent=1 // pred_fallthru
      %v402 = vphi 0, %v398
      %v403 = vphi 0, %v399
      %v404 = vphi 0, %v400
      %v405 = vphi 0, %v401
    %p406 = pneg %p380
    // Predicated region
    $region18: #{tpu_custom_call.1} parent=1 // pred_check
      _
    $region19: #{tpu_custom_call.1} parent=1 // pred_check_branch
      %408 = sbr.rel (%p380) target = $region21
    $region20: #{tpu_custom_call.1} parent=1 // pred_region
      _
    $region21: #{tpu_custom_call.1} parent=1 // pred_fallthru
      %v409 = vphi %v402, %v225
      %v410 = vphi %v403, %v227
      %v411 = vphi %v404, %v374
      %v412 = vphi %v405, %v376
    %v413 = vld [vmem:[#allocation2] sm:$0x1]
    %v414 = vld [vmem:[#allocation2 + $0x1] sm:$0x1]
    %vm415 = vcmask 1040384
    %v416 = vsel %vm415, %v409, -inf
    %vm417 = vcmask 581632
    %v418 = vsel %vm417, %v410, -inf
    %v419 = vmax.f32 %v416, %v418
    %420 = vmax.xlane.f32.xlu0 %v419
    %v421 = vpop.xlane.xlu0 %420
    %v422 = vsel %vm415, %v411, -inf
    %v423 = vsel %vm417, %v412, -inf
    %v424 = vmax.f32 %v422, %v423
    %425 = vmax.xlane.f32.xlu0 %v424
    %v426 = vpop.xlane.xlu0 %425
    %v427 = vmax.f32 %v413, %v421
    %v428 = vmax.f32 %v414, %v426
    %vm429 = vcmp.eq.f32.partialorder %v427, -inf
    %vm430 = vcmp.eq.f32.partialorder %v428, -inf
    %v431 = vsel %vm429, 0.0, %v427
    %v432 = vsel %vm430, 0.0, %v428
    %v433 = vsub.f32 %v413, %v431
    %v434 = vsub.f32 %v414, %v432
    %v435 = vmul.f32 %v433, 1.442695
    %v436 = vpow.pop %v435
    %v437 = vmul.f32 %v434, 1.442695
    %v438 = vpow.pop %v437
    %440 = vset.pattern.permute.xlu0 0
    %441 = vperm.xlu0 %440, %v431
    %v442 = vpop.permute.xlu0 %441
    %v444 = vlaneseq
    %v445 = vshrl.u32 %v444, 7
    %v446 = vsub.s32 0, %v445
    %v447 = vrot.slane %v442, %v446
    %449 = vset.pattern.permute.xlu0 0
    %450 = vperm.xlu0 %449, %v432
    %v451 = vpop.permute.xlu0 %450
    %v453 = vlaneseq
    %v454 = vshrl.u32 %v453, 7
    %v455 = vsub.s32 0, %v454
    %v456 = vrot.slane %v451, %v455
    %v457 = vsub.f32 %v409, %v447
    %v458 = vsub.f32 %v410, %v447
    %v459 = vsub.f32 %v411, %v456
    %v460 = vsub.f32 %v412, %v456
    %v461 = vmul.f32 %v457, 1.442695
    %v462 = vpow.pop %v461
    %v463 = vmul.f32 %v458, 1.442695
    %v464 = vpow.pop %v463
    %v465 = vmul.f32 %v459, 1.442695
    %v466 = vpow.pop %v465
    %v467 = vmul.f32 %v460, 1.442695
    %v468 = vpow.pop %v467
    %v469 = vld [vmem:[#allocation3] sm:$0x1]
    %v470 = vld [vmem:[#allocation3 + $0x1] sm:$0x1]
    %v471 = vmul.f32 %v436, %v469
    %v472 = vmul.f32 %v438, %v470
    %v473 = vsel %vm415, %v462, 0.0
    %v474 = vsel %vm417, %v464, 0.0
    %v475 = vadd.f32 %v473, %v474
    %476 = vadd.xlane.f32.xlu0 %v475
    %v477 = vpop.xlane.xlu0 %476
    %v478 = vsel %vm415, %v466, 0.0
    %v479 = vsel %vm417, %v468, 0.0
    %v480 = vadd.f32 %v478, %v479
    %481 = vadd.xlane.f32.xlu0 %v480
    %v482 = vpop.xlane.xlu0 %481
    %v483 = vadd.f32 %v471, %v477
    %v484 = vadd.f32 %v472, %v482
    %vm485 = vcmask 0
    %486 = vst.msk [vmem:[#allocation3] sm:$0x1] %vm485, %v483
    %487 = vst.msk [vmem:[#allocation3 + $0x1] sm:$0x1] %vm485, %v484
    %vm488 = vcmask 588800
    %v490 = vsel %vm488, %v464, 0
    %492 = vmatprep.subr.mxu0 0.0
    %493 = vmatpush1.msra.mxu0 %v27
    %494 = vmatprep.subr.mxu0 0.0
    %495 = vmatpush1.msra.mxu0 %v28
    %496 = vmatprep.subr.mxu0 0.0
    %497 = vmatpush1.msra.mxu0 %v29
    %498 = vmatprep.subr.mxu0 0.0
    %499 = vmatpush1.msra.mxu0 %v30
    %500 = vmatprep.subr.mxu0 0.0
    %501 = vmatpush1.msra.mxu0 %v31
    %502 = vmatprep.subr.mxu0 0.0
    %503 = vmatpush1.msra.mxu0 %v32
    %504 = vmatprep.subr.mxu0 0.0
    %505 = vmatpush1.msra.mxu0 %v33
    %506 = vmatprep.subr.mxu0 0.0
    %507 = vmatpush1.msra.mxu0 %v34
    %508 = vmatprep.subr.mxu0 0.0
    %509 = vmatpush1.msra.mxu0 %v35
    %510 = vmatprep.subr.mxu0 0.0
    %511 = vmatpush1.msra.mxu0 %v36
    %512 = vmatprep.subr.mxu0 0.0
    %513 = vmatpush1.msra.mxu0 %v37
    %514 = vmatprep.subr.mxu0 0.0
    %515 = vmatpush1.msra.mxu0 %v38
    %516 = vmatprep.subr.mxu0 0.0
    %517 = vmatpush1.msra.mxu0 %v39
    %518 = vmatprep.subr.mxu0 0.0
    %519 = vmatpush1.msra.mxu0 %v40
    %520 = vmatprep.subr.mxu0 0.0
    %521 = vmatpush1.msra.mxu0 %v41
    %522 = vmatprep.subr.mxu0 0.0
    %523 = vmatpush1.msra.mxu0 %v42
    %524 = vmatprep.subr.mxu0 0.0
    %525 = vmatpush1.msra.mxu0 %v43
    %526 = vmatprep.subr.mxu0 0.0
    %527 = vmatpush1.msra.mxu0 %v44
    %528 = vmatprep.subr.mxu0 0.0
    %529 = vmatpush1.msra.mxu0 %v45
    %530 = vmatprep.subr.mxu0 0.0
    %531 = vmatpush1.msra.mxu0 %v46
    %532 = vmatprep.subr.mxu0 0.0
    %533 = vmatpush1.msra.mxu0 %v47
    %534 = vmatprep.subr.mxu0 0.0
    %535 = vmatpush1.msra.mxu0 %v48
    %536 = vmatprep.subr.mxu0 0.0
    %537 = vmatpush1.msra.mxu0 %v49
    %538 = vmatprep.subr.mxu0 0.0
    %539 = vmatpush1.msra.mxu0 %v50
    %540 = vmatprep.subr.mxu0 0.0
    %541 = vmatpush1.msra.mxu0 %v51
    %542 = vmatprep.subr.mxu0 0.0
    %543 = vmatpush1.msra.mxu0 0.0
    %544 = vmatprep.subr.mxu0 0.0
    %545 = vmatpush1.msra.mxu0 0.0
    %546 = vmatprep.subr.mxu0 0.0
    %547 = vmatpush1.msra.mxu0 0.0
    %548 = vmatprep.subr.mxu0 0.0
    %549 = vmatpush1.msra.mxu0 0.0
    %550 = vmatprep.subr.mxu0 0.0
    %551 = vmatpush1.msra.mxu0 0.0
    %552 = vmatprep.subr.mxu0 0.0
    %553 = vmatpush1.msra.mxu0 0.0
    %554 = vmatprep.subr.mxu0 0.0
    %555 = vmatpush1.msra.mxu0 0.0
    %556 = vmatprep.mubr.f32.mxu0 %v490
    %557 = vmatmul.mubr.f32.gmra.mrb[0].mxu0 %v462
    %v558 = vpop.f32.mrb[0].mxu0
    %v559 = vadd.f32 0.0, %v558
    %v560 = vpop.f32.mrb[0].mxu0
    %561 = vdwg.mxu0
    %v563 = vsel %vm488, %v468, 0
    %565 = vmatprep.subr.mxu0 0.0
    %566 = vmatpush1.msra.mxu0 %v52
    %567 = vmatprep.subr.mxu0 0.0
    %568 = vmatpush1.msra.mxu0 %v53
    %569 = vmatprep.subr.mxu0 0.0
    %570 = vmatpush1.msra.mxu0 %v54
    %571 = vmatprep.subr.mxu0 0.0
    %572 = vmatpush1.msra.mxu0 %v55
    %573 = vmatprep.subr.mxu0 0.0
    %574 = vmatpush1.msra.mxu0 %v56
    %575 = vmatprep.subr.mxu0 0.0
    %576 = vmatpush1.msra.mxu0 %v57
    %577 = vmatprep.subr.mxu0 0.0
    %578 = vmatpush1.msra.mxu0 %v58
    %579 = vmatprep.subr.mxu0 0.0
    %580 = vmatpush1.msra.mxu0 %v59
    %581 = vmatprep.subr.mxu0 0.0
    %582 = vmatpush1.msra.mxu0 %v60
    %583 = vmatprep.subr.mxu0 0.0
    %584 = vmatpush1.msra.mxu0 %v61
    %585 = vmatprep.subr.mxu0 0.0
    %586 = vmatpush1.msra.mxu0 %v62
    %587 = vmatprep.subr.mxu0 0.0
    %588 = vmatpush1.msra.mxu0 %v63
    %589 = vmatprep.subr.mxu0 0.0
    %590 = vmatpush1.msra.mxu0 %v64
    %591 = vmatprep.subr.mxu0 0.0
    %592 = vmatpush1.msra.mxu0 %v65
    %593 = vmatprep.subr.mxu0 0.0
    %594 = vmatpush1.msra.mxu0 %v66
    %595 = vmatprep.subr.mxu0 0.0
    %596 = vmatpush1.msra.mxu0 %v67
    %597 = vmatprep.subr.mxu0 0.0
    %598 = vmatpush1.msra.mxu0 %v68
    %599 = vmatprep.subr.mxu0 0.0
    %600 = vmatpush1.msra.mxu0 %v69
    %601 = vmatprep.subr.mxu0 0.0
    %602 = vmatpush1.msra.mxu0 %v70
    %603 = vmatprep.subr.mxu0 0.0
    %604 = vmatpush1.msra.mxu0 %v71
    %605 = vmatprep.subr.mxu0 0.0
    %606 = vmatpush1.msra.mxu0 %v72
    %607 = vmatprep.subr.mxu0 0.0
    %608 = vmatpush1.msra.mxu0 %v73
    %609 = vmatprep.subr.mxu0 0.0
    %610 = vmatpush1.msra.mxu0 %v74
    %611 = vmatprep.subr.mxu0 0.0
    %612 = vmatpush1.msra.mxu0 %v75
    %613 = vmatprep.subr.mxu0 0.0
    %614 = vmatpush1.msra.mxu0 %v76
    %615 = vmatprep.subr.mxu0 0.0
    %616 = vmatpush1.msra.mxu0 0.0
    %617 = vmatprep.subr.mxu0 0.0
    %618 = vmatpush1.msra.mxu0 0.0
    %619 = vmatprep.subr.mxu0 0.0
    %620 = vmatpush1.msra.mxu0 0.0
    %621 = vmatprep.subr.mxu0 0.0
    %622 = vmatpush1.msra.mxu0 0.0
    %623 = vmatprep.subr.mxu0 0.0
    %624 = vmatpush1.msra.mxu0 0.0
    %625 = vmatprep.subr.mxu0 0.0
    %626 = vmatpush1.msra.mxu0 0.0
    %627 = vmatprep.subr.mxu0 0.0
    %628 = vmatpush1.msra.mxu0 0.0
    %629 = vmatprep.mubr.f32.mxu0 %v563
    %630 = vmatmul.mubr.f32.gmra.mrb[0].mxu0 %v466
    %v631 = vpop.f32.mrb[0].mxu0
    %v632 = vadd.f32 0.0, %v631
    %v633 = vpop.f32.mrb[0].mxu0
    %634 = vdwg.mxu0
    %v635 = vld [vmem:[#allocation4] sm:$0x1]
    %v636 = vld [vmem:[#allocation4 + $0x1] sm:$0x1]
    %638 = vset.pattern.permute.xlu0 0
    %639 = vperm.xlu0 %638, %v436
    %v640 = vpop.permute.xlu0 %639
    %v642 = vlaneseq
    %v643 = vshrl.u32 %v642, 7
    %v644 = vsub.s32 0, %v643
    %v645 = vrot.slane %v640, %v644
    %647 = vset.pattern.permute.xlu0 0
    %648 = vperm.xlu0 %647, %v438
    %v649 = vpop.permute.xlu0 %648
    %v651 = vlaneseq
    %v652 = vshrl.u32 %v651, 7
    %v653 = vsub.s32 0, %v652
    %v654 = vrot.slane %v649, %v653
    %v655 = vmul.f32 %v645, %v635
    %v656 = vmul.f32 %v654, %v636
    %v657 = vadd.f32 %v655, %v559
    %v658 = vadd.f32 %v656, %v632
    %vm659 = vcmask 516096
    %660 = vst.msk [vmem:[#allocation4] sm:$0x1] %vm659, %v657
    %661 = vst.msk [vmem:[#allocation4 + $0x1] sm:$0x1] %vm659, %v658
    %662 = vst.msk [vmem:[#allocation2] sm:$0x1] %vm485, %v427
    %663 = vst.msk [vmem:[#allocation2 + $0x1] sm:$0x1] %vm485, %v428
    // Predicated region
    $region22: #{tpu_custom_call.1} parent=1 // pred_check
      %p664 = pneg %p15
    $region23: #{tpu_custom_call.1} parent=1 // pred_check_branch
      %666 = sbr.rel (%p664) target = $region25
    $region24: #{tpu_custom_call.1} parent=1 // pred_region
      %v667 = vld [vmem:[#allocation3] sm:$0x1]
      %v668 = vld [vmem:[#allocation3 + $0x1] sm:$0x1]
      %v669 = vrcp.pop %v667
      %v670 = vrcp.pop %v668
      %v671 = vld [vmem:[#allocation4] sm:$0x1]
      %v672 = vld [vmem:[#allocation4 + $0x1] sm:$0x1]
      %674 = vset.pattern.permute.xlu0 0
      %675 = vperm.xlu0 %674, %v669
      %v676 = vpop.permute.xlu0 %675
      %v678 = vlaneseq
      %v679 = vshrl.u32 %v678, 7
      %v680 = vsub.s32 0, %v679
      %v681 = vrot.slane %v676, %v680
      %683 = vset.pattern.permute.xlu0 0
      %684 = vperm.xlu0 %683, %v670
      %v685 = vpop.permute.xlu0 %684
      %v687 = vlaneseq
      %v688 = vshrl.u32 %v687, 7
      %v689 = vsub.s32 0, %v688
      %v690 = vrot.slane %v685, %v689
      %v691 = vmul.f32 %v671, %v681
      %v692 = vmul.f32 %v672, %v690
      %693 = vst.msk [vmem:[#allocation7] sm:$0x1] %vm659, %v691
      %694 = vst.msk [vmem:[#allocation7 + $0x1] sm:$0x1] %vm659, %v692
    $region25: #{tpu_custom_call.1} parent=1 // pred_fallthru
      _
    // Predicated region
    $region26: #{tpu_custom_call.1} parent=1 // pred_check
      _
    $region27: #{tpu_custom_call.1} parent=1 // pred_check_branch
      %696 = sbr.rel (0) target = $region29
    $region28: #{tpu_custom_call.1} parent=1 // pred_region
      %s698 = ssub.s32 32, 32
      %699 = vsyncadd [#allocation8], %s698
      %s700 = sshll.u32 [#allocation7], 4
      %s701 = int_to_ptr.vmem [resolvable:$true] %s700
      %706 = dma.vmem_to_hbm [thread:$0]  %s701, 32, %s3, [#allocation8], 16, 16, 1
    $region29: #{tpu_custom_call.1} parent=1 // pred_fallthru
      _
    // Predicated region
    $region30: #{tpu_custom_call.1} parent=1 // pred_check
      _
    $region31: #{tpu_custom_call.1} parent=1 // pred_check_branch
      %708 = sbr.rel (0) target = $region33
    $region32: #{tpu_custom_call.1} parent=1 // pred_region
      %709 = dma.done [#allocation8], 32
    $region33: #{tpu_custom_call.1} parent=1 // pred_fallthru
      _
    %710 = vsyncpa [#allocation8], 1

</llo_original>
